<compile_context>
chip_gen: v7x
topology: tpu7x:2x2x1
jax: 0.10.0
libtpu: 0.0.40
codegen_flags: <defaults>
</compile_context>

<pallas_src>
import functools

import jax
import jax.numpy as jnp
from jax.experimental import pallas as pl
from jax.experimental.pallas import tpu as pltpu


def _round_up(n, m):
    return ((n + m - 1) // m) * m


def _lora_kernel(x_ref, a_ref, b_ref, o_ref, h_ref, *, scale):
    # x_ref: (TM, dim)   a_ref: (dim, r)   b_ref: (r, TN)
    # o_ref: (TM, TN)    h_ref: (TM, r) scratch, persists across the N axis.
    j = pl.program_id(1)

    @pl.when(j == 0)
    def _():
        # Cast x to the compute dtype per tile (hidden under DMA) and apply the
        # scale to the narrow (TM, r) intermediate — r/dim_out of the VALU cost
        # of scaling the output tile.
        xc = x_ref[...].astype(a_ref.dtype)
        h = jnp.dot(xc, a_ref[...], preferred_element_type=jnp.float32)
        h_ref[...] = (h * scale).astype(h_ref.dtype)

    out = jnp.dot(h_ref[...], b_ref[...], preferred_element_type=jnp.float32)
    o_ref[...] = out.astype(o_ref.dtype)


def lora_forward(x, A, B, scale, *, compute_dtype=jnp.bfloat16, out_dtype=None,
                 block_m=None, block_n=None,
                 vmem_limit_bytes=48 * 1024 * 1024):
    """x: (..., dim), A: (dim, r), B: (r, dim_out) -> (..., dim_out)."""
    *lead, dim = x.shape
    r, dim_out = B.shape
    assert A.shape == (dim, r)

    out_dtype = x.dtype if out_dtype is None else out_dtype
    M = 1
    for d in lead:
        M *= d
    x2d = x.reshape(M, dim)   # no dtype cast here — avoid an extra HBM pass over x

    cdt = jnp.dtype(compute_dtype) if compute_dtype is not None else jnp.dtype(x.dtype)
    # A/B are tiny (dim*r and r*dim_out); casting them once is negligible and
    # makes both dots native compute-dtype MXU passes with f32 accumulation.
    Ac = A.astype(cdt)
    Bc = B.astype(cdt)

    x_bytes = jnp.dtype(x2d.dtype).itemsize
    o_bytes = jnp.dtype(out_dtype).itemsize
    c_bytes = cdt.itemsize
    row_align = 16 if c_bytes < 4 else 8

    def size_tm(tn):
        # Resident A + B blocks (count double buffering), plus ~4 MiB slack.
        resident = 2 * (dim * r + r * tn) * c_bytes
        budget = max(vmem_limit_bytes - resident - 4 * 1024 * 1024, 1 << 20)
        per_row = (2 * dim * x_bytes        # x tile, double buffered
                   + 2 * tn * o_bytes       # out tile, double buffered
                   + tn * 4                 # f32 matmul result before store cast
                   + r * c_bytes)           # h scratch
        tm = budget // per_row
        tm = max(row_align, min(1024, tm))
        return (tm // row_align) * row_align

    # Choose the dim_out tile.  Only tile dim_out when it would otherwise force
    # the row tile below ~128 rows; partial-width blocks must be 128-aligned.
    if block_n is not None:
        tn = min(block_n, dim_out)
    else:
        tn = dim_out
        if block_m is None and size_tm(dim_out) < 128 and dim_out > 512:
            tn = 512
    if tn < dim_out:
        tn = max(128, (tn // 128) * 128)

    # Choose the row tile.
    tm = block_m if block_m is not None else size_tm(tn)
    tm = min(tm, _round_up(M, row_align))
    tm = max(row_align, (tm // row_align) * row_align)

    grid = (pl.cdiv(M, tm), pl.cdiv(dim_out, tn))

    cost = pl.CostEstimate(
        flops=2 * M * r * (dim + dim_out),
        transcendentals=0,
        bytes_accessed=(x_bytes * M * dim
                        + o_bytes * M * dim_out
                        + c_bytes * dim * r
                        + c_bytes * r * dim_out),
    )

    out2d = pl.pallas_call(
        functools.partial(_lora_kernel, scale=float(scale)),
        out_shape=jax.ShapeDtypeStruct((M, dim_out), out_dtype),
        grid_spec=pltpu.PrefetchScalarGridSpec(
            num_scalar_prefetch=0,
            grid=grid,
            in_specs=[
                pl.BlockSpec((tm, dim), lambda i, j: (i, 0)),   # x: tiled over M, resident over N
                pl.BlockSpec((dim, r), lambda i, j: (0, 0)),    # A: VMEM-resident
                pl.BlockSpec((r, tn), lambda i, j: (0, j)),     # B: tiled over N
            ],
            out_specs=pl.BlockSpec((tm, tn), lambda i, j: (i, j)),
            scratch_shapes=[pltpu.VMEM((tm, r), cdt)],          # h = (x @ A) * scale
        ),
        compiler_params=pltpu.CompilerParams(
            dimension_semantics=("parallel", "arbitrary"),
            vmem_limit_bytes=vmem_limit_bytes,
        ),
        cost_estimate=cost,
    )(x2d, Ac, Bc)

    return out2d.reshape(*lead, dim_out)


if __name__ == "__main__":
    key = jax.random.PRNGKey(0)
    kx, ka, kb, kb2 = jax.random.split(key, 4)

    # Small shapes consistent with the module: x: (batch, seq, dim)
    batch, seq, dim, dim_out, r = 2, 8, 32, 64, 8
    alpha = None
    alpha = alpha if alpha is not None else r      # default(alpha, r)
    scale = alpha / r

    x = jax.random.normal(kx, (batch, seq, dim), dtype=jnp.float32)

    # Parameters as the module's __init__: A = randn(dim, r), B = zeros(r, dim_out)
    A = jax.random.normal(ka, (dim, r), dtype=jnp.float32)
    B = jnp.zeros((r, dim_out), dtype=jnp.float32)

    # 1) Module-default parameters (B = 0): output must be exactly zero.
    out = lora_forward(x, A, B, scale)
    jax.block_until_ready(out)
    ref = x @ ((A @ B) * scale)
    assert out.shape == ref.shape
    assert jnp.allclose(out, ref, atol=1e-6), "mismatch vs reference (zero B)"

    # 2) Non-zero B, full-precision compute path: tight tolerance.
    B2 = 0.02 * jax.random.normal(kb, (r, dim_out), dtype=jnp.float32)
    ref2 = x @ ((A @ B2) * scale)
    out2 = lora_forward(x, A, B2, scale, compute_dtype=jnp.float32)
    jax.block_until_ready(out2)
    assert jnp.allclose(out2, ref2, atol=1e-4, rtol=1e-4), "mismatch (f32 path)"

    # 3) Default bf16 compute path (in-kernel x cast, bf16 A/B/h, f32 accumulation).
    out3 = lora_forward(x, A, B2, scale)
    jax.block_until_ready(out3)
    assert jnp.allclose(out3, ref2, atol=3e-2, rtol=3e-2), "mismatch (bf16 path)"

    # 4) Partial last row block: M = 22, tm = 8 -> 3 blocks, last has 6 valid rows
    #    (masked output stores; no wrapper-side padding or slicing).
    x4 = jax.random.normal(kx, (2, 11, dim), dtype=jnp.float32)
    ref4 = x4 @ ((A @ B2) * scale)
    out4 = lora_forward(x4, A, B2, scale, compute_dtype=jnp.float32, block_m=8)
    jax.block_until_ready(out4)
    assert jnp.allclose(out4, ref4, atol=1e-4, rtol=1e-4), "mismatch (partial M block)"

    # 5) dim_out tiling path: inner "arbitrary" N axis, x tile VMEM-resident,
    #    h scratch reused across N tiles.
    dim_out2 = 256
    B5 = 0.02 * jax.random.normal(kb2, (r, dim_out2), dtype=jnp.float32)
    ref5 = x @ ((A @ B5) * scale)
    out5 = lora_forward(x, A, B5, scale, compute_dtype=jnp.float32, block_n=128)
    jax.block_until_ready(out5)
    assert jnp.allclose(out5, ref5, atol=1e-4, rtol=1e-4), "mismatch (N-tiled path)"

    print("KERNEL_OK")
</pallas_src>

<mosaic_0001>
module attributes {stable_mosaic.version = 11 : i64} {
  func.func @_lora_kernel(%arg0: i32, %arg1: i32, %arg2: memref<16x32xf32, #tpu.memory_space<vmem>>, %arg3: memref<32x8xbf16, #tpu.memory_space<vmem>>, %arg4: memref<8x64xbf16, #tpu.memory_space<vmem>>, %arg5: memref<16x64xf32, #tpu.memory_space<vmem>>, %arg6: memref<16x8xbf16, #tpu.memory_space<vmem>>) attributes {dimension_semantics = [#tpu.dimension_semantics<parallel>, #tpu.dimension_semantics<arbitrary>], iteration_bounds = array<i64: 1, 1>, scalar_prefetch = 0 : i64, scratch_operands = 1 : i64, tpu.core_type = #tpu.core_type<tc>, window_params = [{transform_indices = @transform_0, window_bounds = array<i64: 16, 32>}, {pipeline_mode = #tpu.pipeline_mode<synchronous>, transform_indices = @transform_1, window_bounds = array<i64: 32, 8>}, {transform_indices = @transform_2, window_bounds = array<i64: 8, 64>}, {transform_indices = @transform_3, window_bounds = array<i64: 16, 64>}]} {
    %c0_i32 = arith.constant 0 : i32
    %0 = arith.cmpi eq, %arg1, %c0_i32 : i32
    %1 = arith.extui %0 : i1 to i32
    %c0_i32_0 = arith.constant 0 : i32
    %2 = arith.cmpi ne, %1, %c0_i32_0 : i32
    scf.if %2 {
      %c0_6 = arith.constant 0 : index
      %c0_7 = arith.constant 0 : index
      %7 = vector.load %arg2[%c0_6, %c0_7] : memref<16x32xf32, #tpu.memory_space<vmem>>, vector<16x32xf32>
      %8 = arith.truncf %7 : vector<16x32xf32> to vector<16x32xbf16>
      %c0_8 = arith.constant 0 : index
      %c0_9 = arith.constant 0 : index
      %9 = vector.load %arg3[%c0_8, %c0_9] : memref<32x8xbf16, #tpu.memory_space<vmem>>, vector<32x8xbf16>
      %cst_10 = arith.constant dense<0.000000e+00> : vector<16x8xf32>
      %10 = tpu.matmul %8, %9, %cst_10 {dimension_numbers = #tpu.dot_dimension_numbers<[1], [0], [0], [1], [0, 0, 1, 1], [], []>} : vector<16x32xbf16>, vector<32x8xbf16>, vector<16x8xf32> -> vector<16x8xf32>
      %cst_11 = arith.constant 1.000000e+00 : f32
      %11 = vector.broadcast %cst_11 : f32 to vector<16x8xf32>
      %12 = arith.mulf %10, %11 : vector<16x8xf32>
      %13 = arith.truncf %12 : vector<16x8xf32> to vector<16x8xbf16>
      %c0_12 = arith.constant 0 : index
      %c0_13 = arith.constant 0 : index
      %14 = vector.load %arg6[%c0_12, %c0_13] : memref<16x8xbf16, #tpu.memory_space<vmem>>, vector<16x8xbf16>
      tpu.vector_store %arg6[%c0_12, %c0_13], %13 {strides = array<i32>} : memref<16x8xbf16, #tpu.memory_space<vmem>>, vector<16x8xbf16>,
    } else {
    }
    %c0 = arith.constant 0 : index
    %c0_1 = arith.constant 0 : index
    %3 = vector.load %arg6[%c0, %c0_1] : memref<16x8xbf16, #tpu.memory_space<vmem>>, vector<16x8xbf16>
    %c0_2 = arith.constant 0 : index
    %c0_3 = arith.constant 0 : index
    %4 = vector.load %arg4[%c0_2, %c0_3] : memref<8x64xbf16, #tpu.memory_space<vmem>>, vector<8x64xbf16>
    %cst = arith.constant dense<0.000000e+00> : vector<16x64xf32>
    %5 = tpu.matmul %3, %4, %cst {dimension_numbers = #tpu.dot_dimension_numbers<[1], [0], [0], [1], [0, 0, 1, 1], [], []>} : vector<16x8xbf16>, vector<8x64xbf16>, vector<16x64xf32> -> vector<16x64xf32>
    %c0_4 = arith.constant 0 : index
    %c0_5 = arith.constant 0 : index
    %6 = vector.load %arg5[%c0_4, %c0_5] : memref<16x64xf32, #tpu.memory_space<vmem>>, vector<16x64xf32>
    tpu.vector_store %arg5[%c0_4, %c0_5], %5 {strides = array<i32>} : memref<16x64xf32, #tpu.memory_space<vmem>>, vector<16x64xf32>,
    return
  }
  func.func @transform_0(%arg0: i32, %arg1: i32) -> (i32, i32) {
    %c0_i32 = arith.constant 0 : i32
    %c0_i32_0 = arith.constant 0 : i32
    return %arg0, %c0_i32 : i32, i32
  }
  func.func @transform_1(%arg0: i32, %arg1: i32) -> (i32, i32) {
    %c0_i32 = arith.constant 0 : i32
    %c0_i32_0 = arith.constant 0 : i32
    %c0_i32_1 = arith.constant 0 : i32
    return %c0_i32, %c0_i32_0 : i32, i32
  }
  func.func @transform_2(%arg0: i32, %arg1: i32) -> (i32, i32) {
    %c0_i32 = arith.constant 0 : i32
    %c0_i32_0 = arith.constant 0 : i32
    return %c0_i32, %arg1 : i32, i32
  }
  func.func @transform_3(%arg0: i32, %arg1: i32) -> (i32, i32) {
    %c0_i32 = arith.constant 0 : i32
    return %arg0, %arg1 : i32, i32
  }
}

</mosaic_0001>

<llo_original>
// kernel: tpu_custom_call.1
$region0: #{tpu_custom_call.1}
  #allocation0 [shape = 'u32[]', space=smem, size = 0x4, offset = 0x4, fixed_abs, tag = 'smem constant byte address 0x4 - core index']
  #allocation1 [shape = 'u32[144,128]{1,0:T(1,128)}', space=vmem, size = 0x12000, scoped, tag = 'internal scratch']
  #allocation2 [shape = 'bf16[16,8]{1,0:T(16,128)(2,1)}', space=vmem, size = 0x1000, scoped, tag = 'scratch operand']
  %s0 = inlined_call_operand.vmem [shape: f32[16,32], index: 0, kind: input, shape index: {}]
  %s1 = inlined_call_operand.vmem [shape: bf16[32,8], index: 1, kind: input, shape index: {}]
  %s2 = inlined_call_operand.vmem [shape: bf16[8,64], index: 2, kind: input, shape index: {}]
  %s3 = inlined_call_operand.hbm [shape: f32[16,64], index: 3, kind: output, shape index: {}]
  %s4 = sld [smem:[#allocation0]]
  $region26: #{tpu_custom_call.1} parent=0
    _
  %s6 = ssub.s32 1, %s4
  %s7 = scalar_select 0, %s6, %s4
  $region1: #{tpu_custom_call.1} parent=0
    #allocation3 [shape = 'u8[8192]{0}', space=vmem, size = 0x2000, scoped, tag = 'output window, operand 0, single buffered']
    #allocation4 [shape = 's32[1]{0}', space=sflag, size = 0x4, scoped, tag = 'scoped memory for tpu_custom_call.1']
    %8 = vsyncpa [#allocation4], 0
    // Predicated region
    $region2: #{tpu_custom_call.1} parent=1 // pred_check
      _
    $region3: #{tpu_custom_call.1} parent=1 // pred_check_branch
      %10 = sbr.rel (0) target = $region5
    $region4: #{tpu_custom_call.1} parent=1 // pred_region
      _
    $region5: #{tpu_custom_call.1} parent=1 // pred_fallthru
      _
    // Predicated region
    $region6: #{tpu_custom_call.1} parent=1 // pred_check
      _
    $region7: #{tpu_custom_call.1} parent=1 // pred_check_branch
      %12 = sbr.rel (0) target = $region9
    $region8: #{tpu_custom_call.1} parent=1 // pred_region
      _
    $region9: #{tpu_custom_call.1} parent=1 // pred_fallthru
      _
    // Predicated region
    $region10: #{tpu_custom_call.1} parent=1 // pred_check
      _
    $region11: #{tpu_custom_call.1} parent=1 // pred_check_branch
      %14 = sbr.rel (0) target = $region13
    $region12: #{tpu_custom_call.1} parent=1 // pred_region
      _
    $region13: #{tpu_custom_call.1} parent=1 // pred_fallthru
      _
    %p16 = scmp.eq.s32.totalorder 0, 0
    // Predicated region
    $region14: #{tpu_custom_call.1} parent=1 // pred_check
      %p17 = pneg %p16
    $region15: #{tpu_custom_call.1} parent=1 // pred_check_branch
      %19 = sbr.rel (%p17) target = $region17
    $region16: #{tpu_custom_call.1} parent=1 // pred_region
      %v20 = vld [vmem:[%s0] sm:$0xff]
      %v21 = vld [vmem:[%s0 + $0x8] sm:$0xff]
      %v22 = vpack.c.bf16 %v21, %v20
      %v23 = vld [vmem:[%s1] sm:$0xf]
      %v24 = vld [vmem:[%s1 + $0x4] sm:$0xf]
      %v25 = vld [vmem:[%s1 + $0x8] sm:$0xf]
      %v26 = vld [vmem:[%s1 + $0xc] sm:$0xf]
      %v31 = vunpack.c.l.b16 %v23
      %v32 = vunpack.c.l.b16 %v24
      %v33 = vunpack.c.l.b16 %v25
      %v34 = vunpack.c.l.b16 %v26
      %v35 = vpack.c.b16 %v32, %v31
      %v36 = vpack.c.b16 %v34, %v33
      %vm39 = vcmask 261120
      %v41 = vsel %vm39, %v22, 0
      %43 = vmatprep.subr.bf16.mxu0 0
      %44 = vmatpush1.bf16.msra.mxu0 %v35
      %45 = vmatprep.subr.bf16.mxu0 0
      %46 = vmatpush1.bf16.msra.mxu0 %v36
      %47 = vmatprep.subr.bf16.mxu0 0
      %48 = vmatpush1.bf16.msra.mxu0 0
      %49 = vmatprep.subr.bf16.mxu0 0
      %50 = vmatpush1.bf16.msra.mxu0 0
      %51 = vmatprep.subr.bf16.mxu0 0
      %52 = vmatpush1.bf16.msra.mxu0 0
      %53 = vmatprep.subr.bf16.mxu0 0
      %54 = vmatpush1.bf16.msra.mxu0 0
      %55 = vmatprep.subr.bf16.mxu0 0
      %56 = vmatpush1.bf16.msra.mxu0 0
      %57 = vmatprep.subr.bf16.mxu0 0
      %58 = vmatpush1.bf16.msra.mxu0 0
      %59 = vmatprep.subr.bf16.mxu0 0
      %60 = vmatpush1.bf16.msra.mxu0 0
      %61 = vmatprep.subr.bf16.mxu0 0
      %62 = vmatpush1.bf16.msra.mxu0 0
      %63 = vmatprep.subr.bf16.mxu0 0
      %64 = vmatpush1.bf16.msra.mxu0 0
      %65 = vmatprep.subr.bf16.mxu0 0
      %66 = vmatpush1.bf16.msra.mxu0 0
      %67 = vmatprep.subr.bf16.mxu0 0
      %68 = vmatpush1.bf16.msra.mxu0 0
      %69 = vmatprep.subr.bf16.mxu0 0
      %70 = vmatpush1.bf16.msra.mxu0 0
      %71 = vmatprep.subr.bf16.mxu0 0
      %72 = vmatpush1.bf16.msra.mxu0 0
      %73 = vmatprep.subr.bf16.mxu0 0
      %74 = vmatpush1.bf16.msra.mxu0 0
      %75 = vmatprep.mubr.bf16.mxu0 0
      %76 = vmatmul.mubr.bf16.gmra.mrb[0].mxu0 %v41
      %v77 = vpop.f32.mrb[0].mxu0
      %v78 = vadd.f32 0.0, %v77
      %v79 = vpop.f32.mrb[0].mxu0
      %v80 = vpop.f32.mrb[0].mxu0
      %v81 = vadd.f32 0.0, %v80
      %v82 = vpop.f32.mrb[0].mxu0
      %83 = vdwg.mxu0
      %v84 = vpack.c.bf16 %v81, %v78
      %vm85 = vcmask 64512
      %86 = vst.msk [vmem:[#allocation2] sm:$0xff] %vm85, %v84
    $region17: #{tpu_custom_call.1} parent=1 // pred_fallthru
      _
    %v87 = vld [vmem:[#allocation2] sm:$0xff]
    %v88 = vld [vmem:[%s2] sm:$0xf]
    %vm89 = vcmask 64512
    %v91 = vsel %vm89, %v87, 0
    %vm93 = vcmask 1043456
    %v95 = vsel %vm93, %v88, 0
    %97 = vmatprep.subr.bf16.mxu0 0
    %98 = vmatpush1.bf16.msra.mxu0 %v95
    %99 = vmatprep.subr.bf16.mxu0 0
    %100 = vmatpush1.bf16.msra.mxu0 0
    %101 = vmatprep.subr.bf16.mxu0 0
    %102 = vmatpush1.bf16.msra.mxu0 0
    %103 = vmatprep.subr.bf16.mxu0 0
    %104 = vmatpush1.bf16.msra.mxu0 0
    %105 = vmatprep.subr.bf16.mxu0 0
    %106 = vmatpush1.bf16.msra.mxu0 0
    %107 = vmatprep.subr.bf16.mxu0 0
    %108 = vmatpush1.bf16.msra.mxu0 0
    %109 = vmatprep.subr.bf16.mxu0 0
    %110 = vmatpush1.bf16.msra.mxu0 0
    %111 = vmatprep.subr.bf16.mxu0 0
    %112 = vmatpush1.bf16.msra.mxu0 0
    %113 = vmatprep.subr.bf16.mxu0 0
    %114 = vmatpush1.bf16.msra.mxu0 0
    %115 = vmatprep.subr.bf16.mxu0 0
    %116 = vmatpush1.bf16.msra.mxu0 0
    %117 = vmatprep.subr.bf16.mxu0 0
    %118 = vmatpush1.bf16.msra.mxu0 0
    %119 = vmatprep.subr.bf16.mxu0 0
    %120 = vmatpush1.bf16.msra.mxu0 0
    %121 = vmatprep.subr.bf16.mxu0 0
    %122 = vmatpush1.bf16.msra.mxu0 0
    %123 = vmatprep.subr.bf16.mxu0 0
    %124 = vmatpush1.bf16.msra.mxu0 0
    %125 = vmatprep.subr.bf16.mxu0 0
    %126 = vmatpush1.bf16.msra.mxu0 0
    %127 = vmatprep.subr.bf16.mxu0 0
    %128 = vmatpush1.bf16.msra.mxu0 0
    %129 = vmatprep.mubr.bf16.mxu0 0
    %130 = vmatmul.mubr.bf16.gmra.mrb[0].mxu0 %v91
    %v131 = vpop.f32.mrb[0].mxu0
    %v132 = vadd.f32 0.0, %v131
    %v133 = vpop.f32.mrb[0].mxu0
    %v134 = vpop.f32.mrb[0].mxu0
    %v135 = vadd.f32 0.0, %v134
    %v136 = vpop.f32.mrb[0].mxu0
    %137 = vdwg.mxu0
    %vm138 = vcmask 523264
    %139 = vst.msk [vmem:[#allocation3] sm:$0xff] %vm138, %v132
    %140 = vst.msk [vmem:[#allocation3 + $0x8] sm:$0xff] %vm138, %v135
    // Predicated region
    $region18: #{tpu_custom_call.1} parent=1 // pred_check
      _
    $region19: #{tpu_custom_call.1} parent=1 // pred_check_branch
      %142 = sbr.rel (0) target = $region21
    $region20: #{tpu_custom_call.1} parent=1 // pred_region
      %s144 = ssub.s32 256, 256
      %145 = vsyncadd [#allocation4], %s144
      %s146 = sshll.u32 [#allocation3], 4
      %s147 = int_to_ptr.vmem [resolvable:$true] %s146
      %152 = dma.vmem_to_hbm [thread:$0]  %s147, 256, %s3, [#allocation4], 128, 128, 8
    $region21: #{tpu_custom_call.1} parent=1 // pred_fallthru
      _
    // Predicated region
    $region22: #{tpu_custom_call.1} parent=1 // pred_check
      _
    $region23: #{tpu_custom_call.1} parent=1 // pred_check_branch
      %154 = sbr.rel (0) target = $region25
    $region24: #{tpu_custom_call.1} parent=1 // pred_region
      %155 = dma.done [#allocation4], 256
    $region25: #{tpu_custom_call.1} parent=1 // pred_fallthru
      _
    %156 = vsyncpa [#allocation4], 1

</llo_original>
